<compile_context>
chip_gen: v7x
topology: tpu7x:2x2x1
jax: 0.10.0
libtpu: 0.0.40
codegen_flags: <defaults>
</compile_context>

<pallas_src>
import functools
import math

import jax
import jax.numpy as jnp
from jax import lax
from jax.experimental import pallas as pl
from jax.experimental.pallas import tpu as pltpu


_DEFAULT_BLOCK_BUDGET = 6 * 1024 * 1024   # f32 bytes per block (v7x-safe)


def _round_up(x, m):
    return (x + m - 1) // m * m


def _pick_col_tile(m_padded, max_cols):
    """Largest multiple-of-128 divisor of m_padded that is <= max_cols (>= 128)."""
    q = m_padded // 128
    best = 1
    for d in range(1, q + 1):
        if q % d == 0 and d * 128 <= max_cols:
            best = d
    return best * 128


def _vmem_limit_bytes(block_f32_bytes):
    """Derive a VMEM limit from the block footprint, capped by HW capacity."""
    try:
        cap = pltpu.get_tpu_info().vmem_capacity_bytes
    except Exception:  # conservative fallback: v7x per-TC VMEM
        cap = 64 * 1024 * 1024
    want = max(32 * 1024 * 1024, 10 * block_f32_bytes)
    return int(min(int(cap * 0.9), want))


# ---------------------------------------------------------------------------
# Fast path: softmax axis fully resident in one block.
# ---------------------------------------------------------------------------
def _softmax_resident_kernel(x_ref, o_ref, *, inv_scale):
    """Softmax over axis 1 of a (TB, N, TM) block (softmax axis fully resident)."""
    x = x_ref[...].astype(jnp.float32) * inv_scale            # (TB, N, TM)
    m = jnp.max(x, axis=1, keepdims=True)                     # (TB, 1, TM)
    e = jnp.exp(x - m)                                        # EUP
    s = jnp.sum(e, axis=1, keepdims=True)                     # (TB, 1, TM)
    inv = pl.reciprocal(s, approx=False)                      # exact; keeps 1e-5 tol
    o_ref[...] = (e * inv).astype(o_ref.dtype)


# ---------------------------------------------------------------------------
# Fallback path (very large N): two-pass online softmax.
# ---------------------------------------------------------------------------
def _softmax_stats_kernel(x_ref, m_ref, l_ref, *, inv_scale, n_rows, tn):
    """Running column max / exp-sum over the softmax axis (grid axis 2, arbitrary)."""
    k = pl.program_id(2)

    @pl.when(k == 0)
    def _():
        m_ref[...] = jnp.full_like(m_ref, -jnp.inf)
        l_ref[...] = jnp.zeros_like(l_ref)

    x = x_ref[...].astype(jnp.float32) * inv_scale             # (1, tn, TM)
    row = k * tn + lax.broadcasted_iota(jnp.int32, x.shape, 1)
    x = jnp.where(row < n_rows, x, -jnp.inf)                   # mask ragged tail of N
    m_old = m_ref[...]
    m_new = jnp.maximum(m_old, jnp.max(x, axis=1, keepdims=True))
    l_ref[...] = (l_ref[...] * jnp.exp(m_old - m_new)
                  + jnp.sum(jnp.exp(x - m_new), axis=1, keepdims=True))
    m_ref[...] = m_new


def _softmax_normalize_kernel(x_ref, m_ref, l_ref, o_ref, *, inv_scale):
    """Elementwise exp(x - m) / l on a (1, tn, TM) block."""
    x = x_ref[...].astype(jnp.float32) * inv_scale
    e = jnp.exp(x - m_ref[...])
    inv = pl.reciprocal(l_ref[...], approx=False)
    o_ref[...] = (e * inv).astype(o_ref.dtype)


@functools.partial(jax.jit,
                   static_argnames=("normalization_scale", "block_budget_bytes"))
def softmax_forward(x, *, normalization_scale,
                    block_budget_bytes=_DEFAULT_BLOCK_BUDGET):
    """F.softmax(x / normalization_scale**0.5, dim=1) for x of rank >= 2."""
    assert x.ndim >= 2, x.shape
    B, N = x.shape[0], x.shape[1]
    M = 1
    for d in x.shape[2:]:
        M *= d

    inv_scale = 1.0 / math.sqrt(normalization_scale)
    budget = int(block_budget_bytes)

    # Pad the flattened trailing axis to a lane-dense multiple of 128 so all
    # stores are unmasked full-lane vst (padded columns are sliced off below).
    Mp = max(128, _round_up(M, 128))
    x3 = x.reshape(B, N, M)
    x3p = x3 if Mp == M else jnp.pad(x3, ((0, 0), (0, 0), (0, Mp - M)))

    total = B * N * Mp
    cost = pl.CostEstimate(
        flops=6 * total,                              # scale, sub, mul, reductions
        transcendentals=total,                        # exp
        bytes_accessed=2 * total * x.dtype.itemsize,  # read x + write out
    )

    if N * 128 * 4 <= budget:
        # -------- fast path: whole softmax axis resident per block --------
        max_cols = max(128, (budget // (4 * N)) // 128 * 128)
        tm = _pick_col_tile(Mp, max_cols)
        if tm == Mp:
            tb = min(B, max(1, budget // (4 * N * Mp)))        # batch-tile big slabs
        else:
            tb = 1
        block_bytes = tb * N * tm * 4

        nb = pl.cdiv(B, tb)
        nm = Mp // tm
        if nb >= nm:                                           # balanced megacore split
            grid = (nb, nm)
            imap = lambda b, j: (b, 0, j)                      # noqa: E731
        else:
            grid = (nm, nb)
            imap = lambda j, b: (b, 0, j)                      # noqa: E731

        out3 = pl.pallas_call(
            functools.partial(_softmax_resident_kernel, inv_scale=inv_scale),
            out_shape=jax.ShapeDtypeStruct((B, N, Mp), x.dtype),
            grid_spec=pltpu.PrefetchScalarGridSpec(
                num_scalar_prefetch=0,
                grid=grid,
                in_specs=[pl.BlockSpec((tb, N, tm), imap)],
                out_specs=pl.BlockSpec((tb, N, tm), imap),
            ),
            compiler_params=pltpu.CompilerParams(
                dimension_semantics=("parallel",) * len(grid),
                vmem_limit_bytes=_vmem_limit_bytes(block_bytes),
            ),
            cost_estimate=cost,
        )(x3p)
    else:
        # -------- fallback: two-pass online softmax (very large N) --------
        tm = _pick_col_tile(Mp, max(128, (budget // 32) // 128 * 128))
        tn = max(8, min((budget // (4 * tm)) // 8 * 8, (N // 8) * 8))
        nk = pl.cdiv(N, tn)
        nm = Mp // tm
        block_bytes = tn * tm * 4
        vmem_limit = _vmem_limit_bytes(block_bytes)

        # Pass 1: per-column running max and exp-sum (reduction axis last, arbitrary).
        m_arr, l_arr = pl.pallas_call(
            functools.partial(_softmax_stats_kernel,
                              inv_scale=inv_scale, n_rows=N, tn=tn),
            out_shape=(jax.ShapeDtypeStruct((B, 1, Mp), jnp.float32),
                       jax.ShapeDtypeStruct((B, 1, Mp), jnp.float32)),
            grid_spec=pltpu.PrefetchScalarGridSpec(
                num_scalar_prefetch=0,
                grid=(B, nm, nk),
                in_specs=[pl.BlockSpec((1, tn, tm), lambda b, j, k: (b, k, j))],
                out_specs=(pl.BlockSpec((1, 1, tm), lambda b, j, k: (b, 0, j)),
                           pl.BlockSpec((1, 1, tm), lambda b, j, k: (b, 0, j))),
            ),
            compiler_params=pltpu.CompilerParams(
                dimension_semantics=("parallel", "parallel", "arbitrary"),
                vmem_limit_bytes=vmem_limit,
            ),
        )(x3p)

        # Pass 2: elementwise normalize.
        out3 = pl.pallas_call(
            functools.partial(_softmax_normalize_kernel, inv_scale=inv_scale),
            out_shape=jax.ShapeDtypeStruct((B, N, Mp), x.dtype),
            grid_spec=pltpu.PrefetchScalarGridSpec(
                num_scalar_prefetch=0,
                grid=(B, nk, nm),
                in_specs=[pl.BlockSpec((1, tn, tm), lambda b, k, j: (b, k, j)),
                          pl.BlockSpec((1, 1, tm), lambda b, k, j: (b, 0, j)),
                          pl.BlockSpec((1, 1, tm), lambda b, k, j: (b, 0, j))],
                out_specs=pl.BlockSpec((1, tn, tm), lambda b, k, j: (b, k, j)),
            ),
            compiler_params=pltpu.CompilerParams(
                dimension_semantics=("parallel", "parallel", "parallel"),
                vmem_limit_bytes=vmem_limit,
            ),
            cost_estimate=cost,
        )(x3p, m_arr, l_arr)

    if Mp != M:
        out3 = out3[:, :, :M]
    return out3.reshape(x.shape)


def reference_forward(x, normalization_scale):
    """Pure-JAX reference matching F.softmax(x / scale**0.5, dim=1)."""
    xs = x.astype(jnp.float32) / (normalization_scale ** 0.5)
    return jax.nn.softmax(xs, axis=1).astype(x.dtype)


if __name__ == "__main__":
    key = jax.random.PRNGKey(0)
    k1, k2, k3 = jax.random.split(key, 3)
    scale = 32.0              # normlization_scale passed to the module ctor

    # Case 1: rank-4 input (B, N, H, W) = (2, 4, 16, 16) -> M = 256 (lane-dense).
    x1 = jax.random.normal(k1, (2, 4, 16, 16), dtype=jnp.float32)
    o1 = jax.block_until_ready(softmax_forward(x1, normalization_scale=scale))
    r1 = reference_forward(x1, scale)
    assert o1.shape == x1.shape, o1.shape
    assert jnp.allclose(o1, r1, atol=1e-5, rtol=1e-5), float(jnp.max(jnp.abs(o1 - r1)))
    s1 = jnp.sum(o1, axis=1)                      # softmax over dim=1 -> sums to 1
    assert jnp.allclose(s1, jnp.ones_like(s1), atol=1e-5), "column sums"

    # Case 2: rank-3 input with a ragged trailing dim (M = 20, padded to 128).
    x2 = jax.random.normal(k2, (3, 16, 20), dtype=jnp.float32)
    o2 = jax.block_until_ready(softmax_forward(x2, normalization_scale=scale))
    r2 = reference_forward(x2, scale)
    assert jnp.allclose(o2, r2, atol=1e-5, rtol=1e-5), float(jnp.max(jnp.abs(o2 - r2)))

    # Case 3: exercise the two-pass online-softmax fallback via a tiny block budget.
    x3 = jax.random.normal(k3, (2, 256, 256), dtype=jnp.float32)
    o3 = jax.block_until_ready(
        softmax_forward(x3, normalization_scale=scale, block_budget_bytes=64 * 1024))
    r3 = reference_forward(x3, scale)
    assert jnp.allclose(o3, r3, atol=1e-5, rtol=1e-5), float(jnp.max(jnp.abs(o3 - r3)))

    print("KERNEL_OK")
</pallas_src>

<mosaic_0001>
module attributes {stable_mosaic.version = 11 : i64} {
  func.func @_softmax_resident_kernel(%arg0: i32, %arg1: i32, %arg2: memref<2x4x256xf32, #tpu.memory_space<vmem>>, %arg3: memref<2x4x256xf32, #tpu.memory_space<vmem>>) attributes {dimension_semantics = [#tpu.dimension_semantics<parallel>, #tpu.dimension_semantics<parallel>], iteration_bounds = array<i64: 1, 1>, scalar_prefetch = 0 : i64, scratch_operands = 0 : i64, tpu.core_type = #tpu.core_type<tc>, window_params = [{transform_indices = @transform_0, window_bounds = array<i64: 2, 4, 256>}, {transform_indices = @transform_1, window_bounds = array<i64: 2, 4, 256>}]} {
    %c0 = arith.constant 0 : index
    %c0_0 = arith.constant 0 : index
    %c0_1 = arith.constant 0 : index
    %0 = vector.load %arg2[%c0, %c0_0, %c0_1] : memref<2x4x256xf32, #tpu.memory_space<vmem>>, vector<2x4x256xf32>
    %cst = arith.constant 0.176776692 : f32
    %1 = vector.broadcast %cst : f32 to vector<2x4x256xf32>
    %2 = arith.mulf %0, %1 : vector<2x4x256xf32>
    %cst_2 = arith.constant dense<0xFF800000> : vector<2x256xf32>
    %3 = vector.multi_reduction <maximumf>, %2, %cst_2 [1] : vector<2x4x256xf32> to vector<2x256xf32>
    %4 = vector.shape_cast %3 : vector<2x256xf32> to vector<2x1x256xf32>
    %5 = vector.broadcast %4 : vector<2x1x256xf32> to vector<2x4x256xf32>
    %6 = arith.subf %2, %5 : vector<2x4x256xf32>
    %7 = math.exp %6 : vector<2x4x256xf32>
    %cst_3 = arith.constant dense<0.000000e+00> : vector<2x256xf32>
    %8 = vector.multi_reduction <add>, %7, %cst_3 [1] : vector<2x4x256xf32> to vector<2x256xf32>
    %9 = vector.shape_cast %8 : vector<2x256xf32> to vector<2x1x256xf32>
    %10 = tpu.reciprocal %9 : vector<2x1x256xf32> -> vector<2x1x256xf32>
    %11 = vector.broadcast %10 : vector<2x1x256xf32> to vector<2x4x256xf32>
    %12 = arith.mulf %7, %11 : vector<2x4x256xf32>
    %c0_4 = arith.constant 0 : index
    %c0_5 = arith.constant 0 : index
    %c0_6 = arith.constant 0 : index
    %13 = vector.load %arg3[%c0_4, %c0_5, %c0_6] : memref<2x4x256xf32, #tpu.memory_space<vmem>>, vector<2x4x256xf32>
    tpu.vector_store %arg3[%c0_4, %c0_5, %c0_6], %12 {strides = array<i32>} : memref<2x4x256xf32, #tpu.memory_space<vmem>>, vector<2x4x256xf32>,
    return
  }
  func.func @transform_0(%arg0: i32, %arg1: i32) -> (i32, i32, i32) {
    %c0_i32 = arith.constant 0 : i32
    %c0_i32_0 = arith.constant 0 : i32
    return %arg0, %c0_i32, %arg1 : i32, i32, i32
  }
  func.func @transform_1(%arg0: i32, %arg1: i32) -> (i32, i32, i32) {
    %c0_i32 = arith.constant 0 : i32
    %c0_i32_0 = arith.constant 0 : i32
    return %arg0, %c0_i32, %arg1 : i32, i32, i32
  }
}

</mosaic_0001>

<llo_original>
// kernel: softmax_forward.1
$region0: #{softmax_forward.1}
  #allocation0 [shape = 'u32[]', space=smem, size = 0x4, offset = 0x4, fixed_abs, tag = 'smem constant byte address 0x4 - core index']
  #allocation1 [shape = 'u32[144,128]{1,0:T(1,128)}', space=vmem, size = 0x12000, scoped, tag = 'internal scratch']
  %s0 = inlined_call_operand.vmem [shape: f32[2,4,256], index: 0, kind: input, shape index: {}]
  %s1 = inlined_call_operand.vmem [shape: f32[2,4,256], index: 1, kind: output, shape index: {}]
  %s2 = sld [smem:[#allocation0]]
  $region14: #{softmax_forward.1} parent=0
    _
  %s4 = ssub.s32 1, %s2
  %s5 = scalar_select 0, %s4, %s2
  // Predicated region
  $region2: #{softmax_forward.1} parent=0 // pred_check
    _
  $region3: #{softmax_forward.1} parent=0 // pred_check_branch
    %7 = sbr.rel (0) target = $region5
  $region4: #{softmax_forward.1} parent=0 // pred_region
    _
  $region5: #{softmax_forward.1} parent=0 // pred_fallthru
    _
  %v8 = vld [vmem:[%s0] sm:$0xff]
  %v9 = vld [vmem:[%s0 + $0x8] sm:$0xff]
  %v10 = vmul.f32 %v8, 0.17677669
  %v11 = vmul.f32 %v9, 0.17677669
  %v14 = vcombine.high %v10, %v10
  %v15 = vcombine.high %v11, %v11
  %vm18 = vcmask 1043456
  %v19 = vsel %vm18, %v10, -inf
  %v20 = vrot.slane %v19, 4
  %v21 = vmax.f32 %v19, %v20
  %v22 = vrot.slane %v21, 2
  %v23 = vmax.f32 %v21, %v22
  %v24 = vrot.slane %v23, 1
  %v25 = vmax.f32 %v23, %v24
  %v26 = vsel %vm18, %v14, -inf
  %v27 = vrot.slane %v26, 4
  %v28 = vmax.f32 %v26, %v27
  %v29 = vrot.slane %v28, 2
  %v30 = vmax.f32 %v28, %v29
  %v31 = vrot.slane %v30, 1
  %v32 = vmax.f32 %v30, %v31
  %v33 = vsel %vm18, %v11, -inf
  %v34 = vrot.slane %v33, 4
  %v35 = vmax.f32 %v33, %v34
  %v36 = vrot.slane %v35, 2
  %v37 = vmax.f32 %v35, %v36
  %v38 = vrot.slane %v37, 1
  %v39 = vmax.f32 %v37, %v38
  %v40 = vsel %vm18, %v15, -inf
  %v41 = vrot.slane %v40, 4
  %v42 = vmax.f32 %v40, %v41
  %v43 = vrot.slane %v42, 2
  %v44 = vmax.f32 %v42, %v43
  %v45 = vrot.slane %v44, 1
  %v46 = vmax.f32 %v44, %v45
  %v51 = vcombine.low %v25, %v32
  %v52 = vcombine.low %v39, %v46
  %v55 = vsub.f32 %v10, %v51
  %v56 = vsub.f32 %v11, %v52
  %v57 = vmul.f32 %v55, 1.442695
  %v58 = vpow.pop %v57
  %v59 = vmul.f32 %v56, 1.442695
  %v60 = vpow.pop %v59
  %v63 = vcombine.high %v58, %v58
  %v64 = vcombine.high %v60, %v60
  %v67 = vsel %vm18, %v58, 0.0
  %v68 = vrot.slane %v67, 4
  %v69 = vadd.f32 %v67, %v68
  %v70 = vrot.slane %v69, 2
  %v71 = vadd.f32 %v69, %v70
  %v72 = vrot.slane %v71, 1
  %v73 = vadd.f32 %v71, %v72
  %v74 = vsel %vm18, %v63, 0.0
  %v75 = vrot.slane %v74, 4
  %v76 = vadd.f32 %v74, %v75
  %v77 = vrot.slane %v76, 2
  %v78 = vadd.f32 %v76, %v77
  %v79 = vrot.slane %v78, 1
  %v80 = vadd.f32 %v78, %v79
  %v81 = vsel %vm18, %v60, 0.0
  %v82 = vrot.slane %v81, 4
  %v83 = vadd.f32 %v81, %v82
  %v84 = vrot.slane %v83, 2
  %v85 = vadd.f32 %v83, %v84
  %v86 = vrot.slane %v85, 1
  %v87 = vadd.f32 %v85, %v86
  %v88 = vsel %vm18, %v64, 0.0
  %v89 = vrot.slane %v88, 4
  %v90 = vadd.f32 %v88, %v89
  %v91 = vrot.slane %v90, 2
  %v92 = vadd.f32 %v90, %v91
  %v93 = vrot.slane %v92, 1
  %v94 = vadd.f32 %v92, %v93
  %v95 = vrcp.pop %v73
  %v96 = vrcp.pop %v80
  %v97 = vrcp.pop %v87
  %v98 = vrcp.pop %v94
  %v103 = vcombine.low %v95, %v96
  %v104 = vcombine.low %v97, %v98
  %v107 = vmul.f32 %v58, %v103
  %v108 = vmul.f32 %v60, %v104
  %109 = vst [vmem:[%s1] sm:$0xff] %v107
  %110 = vst [vmem:[%s1 + $0x8] sm:$0xff] %v108
  // Predicated region
  $region6: #{softmax_forward.1} parent=0 // pred_check
    _
  $region7: #{softmax_forward.1} parent=0 // pred_check_branch
    %112 = sbr.rel (0) target = $region9
  $region8: #{softmax_forward.1} parent=0 // pred_region
    _
  $region9: #{softmax_forward.1} parent=0 // pred_fallthru
    _
  // Predicated region
  $region10: #{softmax_forward.1} parent=0 // pred_check
    _
  $region11: #{softmax_forward.1} parent=0 // pred_check_branch
    %114 = sbr.rel (0) target = $region13
  $region12: #{softmax_forward.1} parent=0 // pred_region
    _
  $region13: #{softmax_forward.1} parent=0 // pred_fallthru
    _

</llo_original>
